<compile_context>
chip_gen: v5e
topology: v5e:2x2
jax: 0.10.0
libtpu: 0.0.40
codegen_flags: <defaults>
</compile_context>

<pallas_src>
import functools
import math

import jax
import jax.numpy as jnp
from jax.experimental import pallas as pl
from jax.experimental.pallas import tpu as pltpu

SIGMA = 0.5
ALPHA = 0.8
N_ITER = 10000
IS_TRAIN = True

_LANE = 128
_NEG = -1e30          # finite stand-in for -inf (avoids NaNs in exp/max chains)


def _round_up(x, m):
    return -(-x // m) * m


def _tpu_vmem_and_cores():
    """(vmem bytes per TensorCore, #TensorCores sharing the grid)."""
    try:
        info = pltpu.get_tpu_info()
        vmem = int(getattr(info, "vmem_capacity_bytes", 128 * 1024 * 1024))
    except Exception:
        vmem = 128 * 1024 * 1024
    # v7x: 64 MiB/TC, 2 TCs per chip; v5e/v6e: 128 MiB, 1 TC.
    n_cores = 2 if vmem <= 64 * 1024 * 1024 else 1
    return vmem, n_cores


# ---------------------------------------------------------------------------
# Pallas kernel 1: masked-MSE maps + per-image partial reductions.
# Blocks are lane-dense: (bt, R, 128).  Stats go out as a lane-dense
# (bt, 8, 128) block (sublane-reduced only); lanes are summed outside.
# ---------------------------------------------------------------------------
def _saliency_kernel(gh_ref, gah_ref, pgh_ref, pgah_ref, mask_ref,
                     loss_g_ref, loss_a_ref, stats_ref):
    gh = gh_ref[...]                     # (bt, R, 128)
    gah = gah_ref[...]
    mask = mask_ref[...]
    dg = pgh_ref[...] - gh
    da = pgah_ref[...] - gah
    lg = dg * dg * mask                  # MSELoss(reduction='none') * mask
    la = da * da * mask
    loss_g_ref[...] = lg
    loss_a_ref[...] = la

    pos_g = (gh >= 0.1).astype(jnp.float32)
    pos_a = (gah >= 0.1).astype(jnp.float32)

    def r(x):                            # sublane-reduce only: (bt,R,128)->(bt,1,128)
        return jnp.sum(x, axis=1, keepdims=True)

    zeros = jnp.zeros_like(r(lg))
    stats_ref[...] = jnp.concatenate(
        [r(pos_g), r(lg * pos_g), r(lg),
         r(pos_a), r(la * pos_a), r(la),
         zeros, zeros], axis=1)          # (bt, 8, 128), lane-dense store


def _pick_batch_tile(B, R, lane=_LANE):
    """Generation-aware batch tile + VMEM limit for the saliency kernel."""
    _, n_cores = _tpu_vmem_and_cores()
    if n_cores > 1:                       # v7x: 64 MiB per TC
        budget, vlimit = 26 * 2**20, 36 * 2**20
    else:                                 # v5e / v6e: 128 MiB, single TC
        budget, vlimit = 88 * 2**20, 100 * 2**20
    per_img = 14 * R * lane * 4           # ~7 f32 blocks, double-buffered
    cap = max(1, budget // per_img)
    best = 1
    for d in range(1, B + 1):
        if B % d != 0 or d > cap:
            continue
        steps = B // d
        if n_cores == 1 or steps % n_cores == 0 or B < n_cores:
            best = d
    return best, vlimit


def saliency_maps_and_stats(gh_label, gah_label, p_gh, p_gah, mask):
    B, H, W = gh_label.shape
    P = H * W
    R = -(-P // _LANE)
    P_pad = R * _LANE

    def prep(x):
        x = x.reshape(B, P).astype(jnp.float32)
        if P_pad != P:
            x = jnp.pad(x, ((0, 0), (0, P_pad - P)))
        return x.reshape(B, R, _LANE)

    gh2, gah2, pgh2, pgah2, m2 = (prep(x) for x in
                                  (gh_label, gah_label, p_gh, p_gah, mask))

    bt, vlimit = _pick_batch_tile(B, R)
    vspec = pl.BlockSpec((bt, R, _LANE), lambda b: (b, 0, 0))
    sspec = pl.BlockSpec((bt, 8, _LANE), lambda b: (b, 0, 0))
    loss_g, loss_a, stats_l = pl.pallas_call(
        _saliency_kernel,
        grid=(B // bt,),
        in_specs=[vspec] * 5,
        out_specs=(vspec, vspec, sspec),
        out_shape=(jax.ShapeDtypeStruct((B, R, _LANE), jnp.float32),
                   jax.ShapeDtypeStruct((B, R, _LANE), jnp.float32),
                   jax.ShapeDtypeStruct((B, 8, _LANE), jnp.float32)),
        compiler_params=pltpu.CompilerParams(
            dimension_semantics=("parallel",),
            vmem_limit_bytes=vlimit),
    )(gh2, gah2, pgh2, pgah2, m2)
    stats = jnp.sum(stats_l, axis=-1)      # finish the cross-lane reduce (B, 8)
    return loss_g, loss_a, stats, gh2, gah2, P


# ---------------------------------------------------------------------------
# SaliencyLoss.single_image_loss — hard-negative selection (vmap'd).
# Dynamic-k top-k via one batched sort + cumsum; the no-positive fallback
# reuses the same sorted negatives (no extra top-k pass).
# ---------------------------------------------------------------------------
def _single_image_loss(loss_flat, label_flat, valid, pcnt, psum, nsum, p_real):
    P_pad = loss_flat.shape[1]
    k0 = min(500, p_real)                 # torch.topk(_, 500) assumes P >= 500

    def per_image(li, lbl, pc, ps, ns):
        pci = pc.astype(jnp.int32)
        nci = jnp.int32(p_real) - pci     # negatives counted by label only
        has_pos = pci > 0
        posi = ps / jnp.maximum(pc, 1.0)
        neg_mask = (lbl < 0.1) & valid
        neg_desc = -jnp.sort(-jnp.where(neg_mask, li, -jnp.inf))
        neg_csum = jnp.cumsum(jnp.where(jnp.isfinite(neg_desc), neg_desc, 0.0))
        k = 3 * pci
        kidx = jnp.clip(k - 1, 0, P_pad - 1)
        topk_mean = neg_csum[kidx] / jnp.maximum(k, 1).astype(jnp.float32)
        mean_all_neg = ns / jnp.maximum(nci, 1).astype(jnp.float32)
        nega = jnp.where(nci >= k, topk_mean, mean_all_neg)
        pos_branch = posi + nega
        # no-positive fallback: with pcnt==0 the negatives are the whole valid
        # map, so mean(topk(loss, 500)) == neg_csum[499] / 500 — no extra top_k.
        nopos_branch = neg_csum[k0 - 1] / jnp.float32(k0)
        return jnp.where(has_pos, pos_branch, nopos_branch)

    return jnp.sum(jax.vmap(per_image)(loss_flat, label_flat, pcnt, psum, nsum))


def saliency_loss_fn(gh_label, gah_label, p_gh, p_gah, mask):
    B = gh_label.shape[0]
    loss_g, loss_a, stats, gh2, gah2, P = saliency_maps_and_stats(
        gh_label, gah_label, p_gh, p_gah, mask)
    P_pad = loss_g.shape[1] * loss_g.shape[2]
    lg = loss_g.reshape(B, P_pad)
    la = loss_a.reshape(B, P_pad)
    ghf = gh2.reshape(B, P_pad)
    gahf = gah2.reshape(B, P_pad)
    valid = jnp.arange(P_pad) < P
    # negative sums derived outside the kernel: total - positive
    char_loss = _single_image_loss(lg, ghf, valid, stats[:, 0], stats[:, 1],
                                   stats[:, 2] - stats[:, 1], P)
    affi_loss = _single_image_loss(la, gahf, valid, stats[:, 3], stats[:, 4],
                                   stats[:, 5] - stats[:, 4], P)
    return char_loss / B + affi_loss / B


# ---------------------------------------------------------------------------
# Pallas kernel 2: the two direction CrossEntropy losses fused in one call,
# tiled over N with a resident SMEM accumulator (pl.when init / finalize).
# ---------------------------------------------------------------------------
def _ce_pair_kernel(logits_ref, labels_ref, out_ref, *, n_total, tile_n):
    i = pl.program_id(0)

    @pl.when(i == 0)
    def _():
        out_ref[0, 0] = 0.0
        out_ref[0, 1] = 0.0

    x = logits_ref[...].astype(jnp.float32)              # (2, tn, C)
    lab = labels_ref[...]                                 # (2, tn, 1) int32
    m = jnp.max(x, axis=-1, keepdims=True)
    lse = m + jnp.log(jnp.sum(jnp.exp(x - m), axis=-1, keepdims=True))
    ids = jax.lax.broadcasted_iota(jnp.int32, x.shape, 2)
    tgt = jnp.sum(jnp.where(ids == lab, x, 0.0), axis=-1, keepdims=True)
    per = lse - tgt                                       # (2, tn, 1)
    row = i * tile_n + jax.lax.broadcasted_iota(jnp.int32, per.shape, 1)
    per = jnp.where(row < n_total, per, 0.0)              # mask padded rows
    out_ref[0, 0] += jnp.sum(per[0])
    out_ref[0, 1] += jnp.sum(per[1])

    @pl.when(i == pl.num_programs(0) - 1)
    def _():
        inv = 1.0 / jnp.float32(n_total)
        out_ref[0, 0] = out_ref[0, 0] * inv
        out_ref[0, 1] = out_ref[0, 1] * inv


def direction_loss_fn(a_logits, p_logits, a_label, p_label, sigma=SIGMA):
    n, C = p_logits.shape
    tn = min(256, _round_up(n, 8))
    n_pad = _round_up(n, tn)

    def padN(x):
        return jnp.pad(x, ((0, n_pad - n),) + ((0, 0),) * (x.ndim - 1))

    logits = jnp.stack([padN(p_logits), padN(a_logits)],
                       axis=0).astype(jnp.float32)            # (2, n_pad, C)
    labels = jnp.stack([padN(p_label), padN(a_label)],
                       axis=0).astype(jnp.int32).reshape(2, n_pad, 1)
    out = pl.pallas_call(
        functools.partial(_ce_pair_kernel, n_total=n, tile_n=tn),
        grid=(n_pad // tn,),
        in_specs=[pl.BlockSpec((2, tn, C), lambda i: (0, i, 0)),
                  pl.BlockSpec((2, tn, 1), lambda i: (0, i, 0))],
        out_specs=pl.BlockSpec((1, 2), lambda i: (0, 0),
                               memory_space=pltpu.MemorySpace.SMEM),
        out_shape=jax.ShapeDtypeStruct((1, 2), jnp.float32),
        compiler_params=pltpu.CompilerParams(
            dimension_semantics=("arbitrary",)),
    )(logits, labels)
    return sigma * out[0, 0] + (1.0 - sigma) * out[0, 1]


# ---------------------------------------------------------------------------
# Pallas kernel 3: CTC forward DP (reduction='mean', zero_infinity, blank=0).
# alpha (N, L_pad) lives in VMEM (resident output block); extended-target
# log-probs are pipelined over time in chunks; the serial recurrence is a
# static fully-unrolled loop with a 2-exp logsumexp.
# ---------------------------------------------------------------------------
def _ctc_kernel(alpha0_ref, skip2_ref, lp_ref, out_ref, *,
                total_steps, time_chunk):
    c = pl.program_id(0)

    @pl.when(c == 0)
    def _():
        out_ref[...] = alpha0_ref[...]

    lane = jax.lax.broadcasted_iota(jnp.int32, out_ref.shape, 1)
    m1 = lane >= 1
    m2 = skip2_ref[...] > 0.5             # precomputed (lane>=2) & can_skip
    neg = jnp.float32(_NEG)
    base = c * time_chunk
    ragged = (total_steps % time_chunk) != 0

    alpha = out_ref[...]
    for j in range(time_chunk):           # static, fully unrolled
        lp = lp_ref[j]                     # (N, L_pad)
        a1 = jnp.where(m1, pltpu.roll(alpha, 1, axis=1), neg)
        a2 = jnp.where(m2, pltpu.roll(alpha, 2, axis=1), neg)
        m = jnp.maximum(jnp.maximum(alpha, a1), a2)
        # 3-way logsumexp with only 2 exps: the max term contributes exp(0)=1,
        # the two non-max terms are min(alpha,a1) and min(max(alpha,a1), a2).
        lo = jnp.minimum(alpha, a1)
        hi = jnp.minimum(jnp.maximum(alpha, a1), a2)
        s = 1.0 + jnp.exp(lo - m) + jnp.exp(hi - m)
        new_alpha = m + jnp.log(s) + lp
        if ragged:
            alpha = jnp.where(base + j < total_steps, new_alpha, alpha)
        else:
            alpha = new_alpha
    out_ref[...] = alpha


def ctc_loss(log_probs, targets, input_lengths, target_lengths, blank=0,
             time_chunk=32):
    # TODO(synk): per-sample input_lengths < T are not supported; the module
    # always passes full-length inputs ([T] * N), matching this assumption.
    del input_lengths
    T, N, C = log_probs.shape
    S = targets.shape[1]
    L = 2 * S + 1
    L_pad = max(_LANE, _round_up(L, _LANE))

    # extended targets built directly at L_pad width (padded lanes = blank)
    ext = jnp.full((N, L_pad), blank, dtype=jnp.int32)
    ext = ext.at[:, 1:L:2].set(targets.astype(jnp.int32))
    lp_ext = jnp.take_along_axis(
        log_probs.astype(jnp.float32),
        jnp.broadcast_to(ext[None], (T, N, L_pad)), axis=2)      # (T, N, L_pad)

    lane = jnp.arange(L_pad)[None, :]
    same_two_back = jnp.concatenate(
        [jnp.ones((N, 2), bool), ext[:, 2:] == ext[:, :-2]], axis=1)
    skip2 = ((ext != blank) & (~same_two_back) &
             (lane >= 2)).astype(jnp.float32)                    # (N, L_pad)

    alpha0 = jnp.full((N, L_pad), _NEG, jnp.float32)
    alpha0 = alpha0.at[:, 0].set(lp_ext[0, :, 0])
    alpha0 = alpha0.at[:, 1].set(
        jnp.where(target_lengths > 0, lp_ext[0, :, 1], _NEG))

    steps = T - 1
    if steps > 0:
        time_chunk = max(1, min(time_chunk, steps))
        n_chunks = -(-steps // time_chunk)
        pad_t = n_chunks * time_chunk - steps
        lp_rest = lp_ext[1:]
        if pad_t:
            lp_rest = jnp.pad(lp_rest, ((0, pad_t), (0, 0), (0, 0)))
        alpha = pl.pallas_call(
            functools.partial(_ctc_kernel, total_steps=steps,
                              time_chunk=time_chunk),
            grid=(n_chunks,),
            in_specs=[pl.BlockSpec((N, L_pad), lambda c: (0, 0)),
                      pl.BlockSpec((N, L_pad), lambda c: (0, 0)),
                      pl.BlockSpec((time_chunk, N, L_pad), lambda c: (c, 0, 0))],
            out_specs=pl.BlockSpec((N, L_pad), lambda c: (0, 0)),
            out_shape=jax.ShapeDtypeStruct((N, L_pad), jnp.float32),
            compiler_params=pltpu.CompilerParams(
                dimension_semantics=("arbitrary",)),
        )(alpha0, skip2, lp_rest)
    else:
        alpha = alpha0

    idx_last = (2 * target_lengths).astype(jnp.int32)
    l1 = jnp.take_along_axis(alpha, idx_last[:, None], axis=1)[:, 0]
    l2 = jnp.take_along_axis(alpha, jnp.maximum(idx_last - 1, 0)[:, None],
                             axis=1)[:, 0]
    l2 = jnp.where(target_lengths > 0, l2, jnp.float32(_NEG))   # empty targets
    m = jnp.maximum(l1, l2)
    ll = m + jnp.log(jnp.exp(l1 - m) + jnp.exp(l2 - m))
    loss = -ll
    loss = jnp.where(loss > 1e29, 0.0, loss)                 # zero_infinity
    loss = loss / jnp.maximum(target_lengths, 1).astype(jnp.float32)
    return jnp.mean(loss)                                    # reduction='mean'


# ---------------------------------------------------------------------------
# Losses.forward
# ---------------------------------------------------------------------------
def losses_forward(results, labels, i=0):
    saliency_results, direction_results, marking_results = results
    saliency_labels, direction_labels, marking_labels = labels

    text_map, link_map = saliency_results
    text_lbl, link_lbl, conf_map, _confidence = saliency_labels
    sal = saliency_loss_fn(text_lbl, link_lbl, text_map, link_map, conf_map)

    a, p = direction_results
    a_label, p_label = direction_labels
    dirn = direction_loss_fn(a, p, a_label, p_label, SIGMA)

    marking_probs = marking_results
    T, N, _ = marking_probs.shape
    input_lengths = jnp.full((N,), T, dtype=jnp.int32)   # [T] * N as in the module
    targets, target_lengths = marking_labels
    rec = ctc_loss(marking_probs, targets, input_lengths, target_lengths)

    if IS_TRAIN:
        lamb = 1.0 / (1.0 + math.exp((i - N_ITER // 2) / (ALPHA * N_ITER)))
    else:
        lamb = 0.5
    total = (1.0 - lamb) * sal + 0.5 * lamb * (dirn + rec)
    return total, {'saliency_loss': sal, 'direction_loss': dirn,
                   'recognition_loss': rec}


if __name__ == "__main__":
    key = jax.random.PRNGKey(0)
    ks = jax.random.split(key, 12)

    # saliency: (B, H, W); H*W >= 500 so the top-500 fallback path is well-defined
    B, H, W = 2, 32, 32
    gh_label = jax.random.uniform(ks[0], (B, H, W), jnp.float32)
    gah_label = jax.random.uniform(ks[1], (B, H, W), jnp.float32)
    p_gh = jax.random.uniform(ks[2], (B, H, W), jnp.float32)
    p_gah = jax.random.uniform(ks[3], (B, H, W), jnp.float32)
    conf_map = jax.random.uniform(ks[4], (B, H, W), jnp.float32)

    # direction: (N, C) logits + int labels
    Nd, Cd = 8, 16
    a_logits = jax.random.normal(ks[5], (Nd, Cd), jnp.float32)
    p_logits = jax.random.normal(ks[6], (Nd, Cd), jnp.float32)
    a_label = jax.random.randint(ks[7], (Nd,), 0, Cd, jnp.int32)
    p_label = jax.random.randint(ks[8], (Nd,), 0, Cd, jnp.int32)

    # recognition: (T, N, C) log-probs (CTCLoss expects log-probabilities)
    T, Nr, Cr, S = 12, 2, 10, 4
    marking_probs = jax.nn.log_softmax(
        jax.random.normal(ks[9], (T, Nr, Cr), jnp.float32), axis=-1)
    targets = jax.random.randint(ks[10], (Nr, S), 1, Cr, jnp.int32)
    target_lengths = jnp.array([4, 3], dtype=jnp.int32)

    results = ((p_gh, p_gah), (a_logits, p_logits), marking_probs)
    labels = ((gh_label, gah_label, conf_map, jnp.float32(1.0)),
              (a_label, p_label),
              (targets, target_lengths))

    total, parts = losses_forward(results, labels, i=0)
    total = jax.block_until_ready(total)
    parts = {k: float(v) for k, v in parts.items()}
    assert bool(jnp.isfinite(total)), parts
    print("KERNEL_OK")
</pallas_src>

<mosaic_0001>
module attributes {stable_mosaic.version = 11 : i64} {
  func.func @_saliency_kernel(%arg0: i32, %arg1: memref<2x8x128xf32, #tpu.memory_space<vmem>>, %arg2: memref<2x8x128xf32, #tpu.memory_space<vmem>>, %arg3: memref<2x8x128xf32, #tpu.memory_space<vmem>>, %arg4: memref<2x8x128xf32, #tpu.memory_space<vmem>>, %arg5: memref<2x8x128xf32, #tpu.memory_space<vmem>>, %arg6: memref<2x8x128xf32, #tpu.memory_space<vmem>>, %arg7: memref<2x8x128xf32, #tpu.memory_space<vmem>>, %arg8: memref<2x8x128xf32, #tpu.memory_space<vmem>>) attributes {dimension_semantics = [#tpu.dimension_semantics<parallel>], iteration_bounds = array<i64: 1>, scalar_prefetch = 0 : i64, scratch_operands = 0 : i64, tpu.core_type = #tpu.core_type<tc>, window_params = [{transform_indices = @transform_0, window_bounds = array<i64: 2, 8, 128>}, {transform_indices = @transform_1, window_bounds = array<i64: 2, 8, 128>}, {transform_indices = @transform_2, window_bounds = array<i64: 2, 8, 128>}, {transform_indices = @transform_3, window_bounds = array<i64: 2, 8, 128>}, {transform_indices = @transform_4, window_bounds = array<i64: 2, 8, 128>}, {transform_indices = @transform_5, window_bounds = array<i64: 2, 8, 128>}, {transform_indices = @transform_6, window_bounds = array<i64: 2, 8, 128>}, {transform_indices = @transform_7, window_bounds = array<i64: 2, 8, 128>}]} {
    %c0 = arith.constant 0 : index
    %c0_0 = arith.constant 0 : index
    %c0_1 = arith.constant 0 : index
    %0 = vector.load %arg1[%c0, %c0_0, %c0_1] : memref<2x8x128xf32, #tpu.memory_space<vmem>>, vector<2x8x128xf32>
    %c0_2 = arith.constant 0 : index
    %c0_3 = arith.constant 0 : index
    %c0_4 = arith.constant 0 : index
    %1 = vector.load %arg2[%c0_2, %c0_3, %c0_4] : memref<2x8x128xf32, #tpu.memory_space<vmem>>, vector<2x8x128xf32>
    %c0_5 = arith.constant 0 : index
    %c0_6 = arith.constant 0 : index
    %c0_7 = arith.constant 0 : index
    %2 = vector.load %arg5[%c0_5, %c0_6, %c0_7] : memref<2x8x128xf32, #tpu.memory_space<vmem>>, vector<2x8x128xf32>
    %c0_8 = arith.constant 0 : index
    %c0_9 = arith.constant 0 : index
    %c0_10 = arith.constant 0 : index
    %3 = vector.load %arg3[%c0_8, %c0_9, %c0_10] : memref<2x8x128xf32, #tpu.memory_space<vmem>>, vector<2x8x128xf32>
    %4 = arith.subf %3, %0 : vector<2x8x128xf32>
    %c0_11 = arith.constant 0 : index
    %c0_12 = arith.constant 0 : index
    %c0_13 = arith.constant 0 : index
    %5 = vector.load %arg4[%c0_11, %c0_12, %c0_13] : memref<2x8x128xf32, #tpu.memory_space<vmem>>, vector<2x8x128xf32>
    %6 = arith.subf %5, %1 : vector<2x8x128xf32>
    %7 = arith.mulf %4, %4 : vector<2x8x128xf32>
    %8 = arith.mulf %7, %2 : vector<2x8x128xf32>
    %9 = arith.mulf %6, %6 : vector<2x8x128xf32>
    %10 = arith.mulf %9, %2 : vector<2x8x128xf32>
    %c0_14 = arith.constant 0 : index
    %c0_15 = arith.constant 0 : index
    %c0_16 = arith.constant 0 : index
    %11 = vector.load %arg6[%c0_14, %c0_15, %c0_16] : memref<2x8x128xf32, #tpu.memory_space<vmem>>, vector<2x8x128xf32>
    tpu.vector_store %arg6[%c0_14, %c0_15, %c0_16], %8 {strides = array<i32>} : memref<2x8x128xf32, #tpu.memory_space<vmem>>, vector<2x8x128xf32>,
    %c0_17 = arith.constant 0 : index
    %c0_18 = arith.constant 0 : index
    %c0_19 = arith.constant 0 : index
    %12 = vector.load %arg7[%c0_17, %c0_18, %c0_19] : memref<2x8x128xf32, #tpu.memory_space<vmem>>, vector<2x8x128xf32>
    tpu.vector_store %arg7[%c0_17, %c0_18, %c0_19], %10 {strides = array<i32>} : memref<2x8x128xf32, #tpu.memory_space<vmem>>, vector<2x8x128xf32>,
    %cst = arith.constant 1.000000e-01 : f32
    %13 = vector.broadcast %cst : f32 to vector<2x8x128xf32>
    %14 = arith.cmpf oge, %0, %13 : vector<2x8x128xf32>
    %15 = arith.extui %14 : vector<2x8x128xi1> to vector<2x8x128xi32>
    %16 = arith.sitofp %15 : vector<2x8x128xi32> to vector<2x8x128xf32>
    %cst_20 = arith.constant 1.000000e-01 : f32
    %17 = vector.broadcast %cst_20 : f32 to vector<2x8x128xf32>
    %18 = arith.cmpf oge, %1, %17 : vector<2x8x128xf32>
    %19 = arith.extui %18 : vector<2x8x128xi1> to vector<2x8x128xi32>
    %20 = arith.sitofp %19 : vector<2x8x128xi32> to vector<2x8x128xf32>
    %cst_21 = arith.constant 0.000000e+00 : f32
    %21 = vector.broadcast %cst_21 : f32 to vector<2x1x128xf32>
    %cst_22 = arith.constant dense<0.000000e+00> : vector<2x128xf32>
    %22 = vector.multi_reduction <add>, %16, %cst_22 [1] : vector<2x8x128xf32> to vector<2x128xf32>
    %23 = vector.shape_cast %22 : vector<2x128xf32> to vector<2x1x128xf32>
    %24 = arith.mulf %8, %16 : vector<2x8x128xf32>
    %cst_23 = arith.constant dense<0.000000e+00> : vector<2x128xf32>
    %25 = vector.multi_reduction <add>, %24, %cst_23 [1] : vector<2x8x128xf32> to vector<2x128xf32>
    %26 = vector.shape_cast %25 : vector<2x128xf32> to vector<2x1x128xf32>
    %cst_24 = arith.constant dense<0.000000e+00> : vector<2x128xf32>
    %27 = vector.multi_reduction <add>, %8, %cst_24 [1] : vector<2x8x128xf32> to vector<2x128xf32>
    %28 = vector.shape_cast %27 : vector<2x128xf32> to vector<2x1x128xf32>
    %cst_25 = arith.constant dense<0.000000e+00> : vector<2x128xf32>
    %29 = vector.multi_reduction <add>, %20, %cst_25 [1] : vector<2x8x128xf32> to vector<2x128xf32>
    %30 = vector.shape_cast %29 : vector<2x128xf32> to vector<2x1x128xf32>
    %31 = arith.mulf %10, %20 : vector<2x8x128xf32>
    %cst_26 = arith.constant dense<0.000000e+00> : vector<2x128xf32>
    %32 = vector.multi_reduction <add>, %31, %cst_26 [1] : vector<2x8x128xf32> to vector<2x128xf32>
    %33 = vector.shape_cast %32 : vector<2x128xf32> to vector<2x1x128xf32>
    %cst_27 = arith.constant dense<0.000000e+00> : vector<2x128xf32>
    %34 = vector.multi_reduction <add>, %10, %cst_27 [1] : vector<2x8x128xf32> to vector<2x128xf32>
    %35 = vector.shape_cast %34 : vector<2x128xf32> to vector<2x1x128xf32>
    %36 = tpu.concatenate %23, %26, %28, %30, %33, %35, %21, %21 in 1 : vector<2x1x128xf32>, vector<2x1x128xf32>, vector<2x1x128xf32>, vector<2x1x128xf32>, vector<2x1x128xf32>, vector<2x1x128xf32>, vector<2x1x128xf32>, vector<2x1x128xf32> -> vector<2x8x128xf32>
    %c0_28 = arith.constant 0 : index
    %c0_29 = arith.constant 0 : index
    %c0_30 = arith.constant 0 : index
    %37 = vector.load %arg8[%c0_28, %c0_29, %c0_30] : memref<2x8x128xf32, #tpu.memory_space<vmem>>, vector<2x8x128xf32>
    tpu.vector_store %arg8[%c0_28, %c0_29, %c0_30], %36 {strides = array<i32>} : memref<2x8x128xf32, #tpu.memory_space<vmem>>, vector<2x8x128xf32>,
    return
  }
  func.func @transform_0(%arg0: i32) -> (i32, i32, i32) {
    %c0_i32 = arith.constant 0 : i32
    %c0_i32_0 = arith.constant 0 : i32
    %c0_i32_1 = arith.constant 0 : i32
    return %arg0, %c0_i32, %c0_i32_0 : i32, i32, i32
  }
  func.func @transform_1(%arg0: i32) -> (i32, i32, i32) {
    %c0_i32 = arith.constant 0 : i32
    %c0_i32_0 = arith.constant 0 : i32
    %c0_i32_1 = arith.constant 0 : i32
    return %arg0, %c0_i32, %c0_i32_0 : i32, i32, i32
  }
  func.func @transform_2(%arg0: i32) -> (i32, i32, i32) {
    %c0_i32 = arith.constant 0 : i32
    %c0_i32_0 = arith.constant 0 : i32
    %c0_i32_1 = arith.constant 0 : i32
    return %arg0, %c0_i32, %c0_i32_0 : i32, i32, i32
  }
  func.func @transform_3(%arg0: i32) -> (i32, i32, i32) {
    %c0_i32 = arith.constant 0 : i32
    %c0_i32_0 = arith.constant 0 : i32
    %c0_i32_1 = arith.constant 0 : i32
    return %arg0, %c0_i32, %c0_i32_0 : i32, i32, i32
  }
  func.func @transform_4(%arg0: i32) -> (i32, i32, i32) {
    %c0_i32 = arith.constant 0 : i32
    %c0_i32_0 = arith.constant 0 : i32
    %c0_i32_1 = arith.constant 0 : i32
    return %arg0, %c0_i32, %c0_i32_0 : i32, i32, i32
  }
  func.func @transform_5(%arg0: i32) -> (i32, i32, i32) {
    %c0_i32 = arith.constant 0 : i32
    %c0_i32_0 = arith.constant 0 : i32
    %c0_i32_1 = arith.constant 0 : i32
    return %arg0, %c0_i32, %c0_i32_0 : i32, i32, i32
  }
  func.func @transform_6(%arg0: i32) -> (i32, i32, i32) {
    %c0_i32 = arith.constant 0 : i32
    %c0_i32_0 = arith.constant 0 : i32
    %c0_i32_1 = arith.constant 0 : i32
    return %arg0, %c0_i32, %c0_i32_0 : i32, i32, i32
  }
  func.func @transform_7(%arg0: i32) -> (i32, i32, i32) {
    %c0_i32 = arith.constant 0 : i32
    %c0_i32_0 = arith.constant 0 : i32
    %c0_i32_1 = arith.constant 0 : i32
    return %arg0, %c0_i32, %c0_i32_0 : i32, i32, i32
  }
}

</mosaic_0001>

<llo_original>
// kernel: tpu_custom_call.1
$region0: #{tpu_custom_call.1}
  #allocation0 [shape = 'u32[]', space=smem, size = 0x4, offset = 0x4, fixed_abs, tag = 'smem constant byte address 0x4 - core index']
  #allocation1 [shape = 'u32[72,128]{1,0:T(1,128)}', space=vmem, size = 0x9000, scoped, tag = 'internal scratch']
  %s0 = inlined_call_operand.hbm [shape: f32[2,8,128], index: 0, kind: input, shape index: {}]
  %s1 = inlined_call_operand.hbm [shape: f32[2,8,128], index: 1, kind: input, shape index: {}]
  %s2 = inlined_call_operand.hbm [shape: f32[2,8,128], index: 2, kind: input, shape index: {}]
  %s3 = inlined_call_operand.hbm [shape: f32[2,8,128], index: 3, kind: input, shape index: {}]
  %s4 = inlined_call_operand.hbm [shape: f32[2,8,128], index: 4, kind: input, shape index: {}]
  %s5 = inlined_call_operand.hbm [shape: f32[2,8,128], index: 5, kind: output, shape index: {0}]
  %s6 = inlined_call_operand.hbm [shape: f32[2,8,128], index: 6, kind: output, shape index: {1}]
  %s7 = inlined_call_operand.hbm [shape: f32[2,8,128], index: 7, kind: output, shape index: {2}]
  %8 = xla_tuple %s5, %s6, %s7
  %s9 = sld [smem:[#allocation0]]
  $region66: #{tpu_custom_call.1} parent=0
    _
  %s11 = ssub.s32 1, %s9
  %s12 = scalar_select 0, %s11, %s9
  $region1: #{tpu_custom_call.1} parent=0
    #allocation2 [shape = 'u8[8192]{0}', space=vmem, size = 0x2000, scoped, tag = 'input window, operand 0, single buffered']
    #allocation3 [shape = 's32[1]{0}', space=sflag, size = 0x4, scoped, tag = 'scoped memory for tpu_custom_call.1']
    #allocation4 [shape = 's32[1]{0}', space=sflag, size = 0x4, scoped, tag = 'scoped memory for tpu_custom_call.1']
    #allocation5 [shape = 'u8[8192]{0}', space=vmem, size = 0x2000, scoped, tag = 'input window, operand 1, single buffered']
    #allocation6 [shape = 's32[1]{0}', space=sflag, size = 0x4, scoped, tag = 'scoped memory for tpu_custom_call.1']
    #allocation7 [shape = 'u8[8192]{0}', space=vmem, size = 0x2000, scoped, tag = 'input window, operand 2, single buffered']
    #allocation8 [shape = 'u8[8192]{0}', space=vmem, size = 0x2000, scoped, tag = 'input window, operand 3, single buffered']
    #allocation9 [shape = 's32[1]{0}', space=sflag, size = 0x4, scoped, tag = 'scoped memory for tpu_custom_call.1']
    #allocation10 [shape = 'u8[8192]{0}', space=vmem, size = 0x2000, scoped, tag = 'input window, operand 4, single buffered']
    #allocation11 [shape = 'u8[8192]{0}', space=vmem, size = 0x2000, scoped, tag = 'output window, operand 0, single buffered']
    #allocation12 [shape = 'u8[8192]{0}', space=vmem, size = 0x2000, scoped, tag = 'output window, operand 1, single buffered']
    #allocation13 [shape = 's32[1]{0}', space=sflag, size = 0x4, scoped, tag = 'scoped memory for tpu_custom_call.1']
    #allocation14 [shape = 'u8[8192]{0}', space=vmem, size = 0x2000, scoped, tag = 'output window, operand 2, single buffered']
    %13 = vsyncpa [#allocation3], 0
    %14 = vsyncpa [#allocation6], 0
    %15 = vsyncpa [#allocation9], 0
    %16 = vsyncpa [#allocation4], 0
    %17 = vsyncpa [#allocation13], 0
    // Predicated region
    $region2: #{tpu_custom_call.1} parent=1 // pred_check
      _
    $region3: #{tpu_custom_call.1} parent=1 // pred_check_branch
      %19 = sbr.rel (0) target = $region5
    $region4: #{tpu_custom_call.1} parent=1 // pred_region
      %21 = vsyncadd [#allocation3], 0
      %s22 = sshll.u32 %s0, 4
      %s23 = int_to_ptr.hbm [resolvable:$true] %s22
      %s24 = sshll.u32 [#allocation2], 4
      %s25 = int_to_ptr.vmem [resolvable:$true] %s24
      %30 = dma.hbm_to_vmem [thread:$0]  %s23, 256, %s25, [#allocation3], 128, 128, 8
    $region5: #{tpu_custom_call.1} parent=1 // pred_fallthru
      _
    // Predicated region
    $region6: #{tpu_custom_call.1} parent=1 // pred_check
      _
    $region7: #{tpu_custom_call.1} parent=1 // pred_check_branch
      %32 = sbr.rel (0) target = $region9
    $region8: #{tpu_custom_call.1} parent=1 // pred_region
      %34 = vsyncadd [#allocation6], 0
      %s35 = sshll.u32 %s1, 4
      %s36 = int_to_ptr.hbm [resolvable:$true] %s35
      %s37 = sshll.u32 [#allocation5], 4
      %s38 = int_to_ptr.vmem [resolvable:$true] %s37
      %43 = dma.hbm_to_vmem [thread:$0]  %s36, 256, %s38, [#allocation6], 128, 128, 8
    $region9: #{tpu_custom_call.1} parent=1 // pred_fallthru
      _
    // Predicated region
    $region10: #{tpu_custom_call.1} parent=1 // pred_check
      _
    $region11: #{tpu_custom_call.1} parent=1 // pred_check_branch
      %45 = sbr.rel (0) target = $region13
    $region12: #{tpu_custom_call.1} parent=1 // pred_region
      %47 = vsyncadd [#allocation6], 0
      %s48 = sshll.u32 %s2, 4
      %s49 = int_to_ptr.hbm [resolvable:$true] %s48
      %s50 = sshll.u32 [#allocation7], 4
      %s51 = int_to_ptr.vmem [resolvable:$true] %s50
      %56 = dma.hbm_to_vmem [thread:$0]  %s49, 256, %s51, [#allocation6], 128, 128, 8
    $region13: #{tpu_custom_call.1} parent=1 // pred_fallthru
      _
    // Predicated region
    $region14: #{tpu_custom_call.1} parent=1 // pred_check
      _
    $region15: #{tpu_custom_call.1} parent=1 // pred_check_branch
      %58 = sbr.rel (0) target = $region17
    $region16: #{tpu_custom_call.1} parent=1 // pred_region
      %60 = vsyncadd [#allocation9], 0
      %s61 = sshll.u32 %s3, 4
      %s62 = int_to_ptr.hbm [resolvable:$true] %s61
      %s63 = sshll.u32 [#allocation8], 4
      %s64 = int_to_ptr.vmem [resolvable:$true] %s63
      %69 = dma.hbm_to_vmem [thread:$0]  %s62, 256, %s64, [#allocation9], 128, 128, 8
    $region17: #{tpu_custom_call.1} parent=1 // pred_fallthru
      _
    // Predicated region
    $region18: #{tpu_custom_call.1} parent=1 // pred_check
      _
    $region19: #{tpu_custom_call.1} parent=1 // pred_check_branch
      %71 = sbr.rel (0) target = $region21
    $region20: #{tpu_custom_call.1} parent=1 // pred_region
      %73 = vsyncadd [#allocation9], 0
      %s74 = sshll.u32 %s4, 4
      %s75 = int_to_ptr.hbm [resolvable:$true] %s74
      %s76 = sshll.u32 [#allocation10], 4
      %s77 = int_to_ptr.vmem [resolvable:$true] %s76
      %82 = dma.hbm_to_vmem [thread:$0]  %s75, 256, %s77, [#allocation9], 128, 128, 8
    $region21: #{tpu_custom_call.1} parent=1 // pred_fallthru
      _
    // Predicated region
    $region22: #{tpu_custom_call.1} parent=1 // pred_check
      _
    $region23: #{tpu_custom_call.1} parent=1 // pred_check_branch
      %84 = sbr.rel (0) target = $region25
    $region24: #{tpu_custom_call.1} parent=1 // pred_region
      %86 = dma.done [#allocation3], 256
    $region25: #{tpu_custom_call.1} parent=1 // pred_fallthru
      _
    // Predicated region
    $region26: #{tpu_custom_call.1} parent=1 // pred_check
      _
    $region27: #{tpu_custom_call.1} parent=1 // pred_check_branch
      %88 = sbr.rel (0) target = $region29
    $region28: #{tpu_custom_call.1} parent=1 // pred_region
      %90 = dma.done [#allocation6], 256
    $region29: #{tpu_custom_call.1} parent=1 // pred_fallthru
      _
    // Predicated region
    $region30: #{tpu_custom_call.1} parent=1 // pred_check
      _
    $region31: #{tpu_custom_call.1} parent=1 // pred_check_branch
      %92 = sbr.rel (0) target = $region33
    $region32: #{tpu_custom_call.1} parent=1 // pred_region
      %94 = dma.done [#allocation6], 256
    $region33: #{tpu_custom_call.1} parent=1 // pred_fallthru
      _
    // Predicated region
    $region34: #{tpu_custom_call.1} parent=1 // pred_check
      _
    $region35: #{tpu_custom_call.1} parent=1 // pred_check_branch
      %96 = sbr.rel (0) target = $region37
    $region36: #{tpu_custom_call.1} parent=1 // pred_region
      %98 = dma.done [#allocation9], 256
    $region37: #{tpu_custom_call.1} parent=1 // pred_fallthru
      _
    // Predicated region
    $region38: #{tpu_custom_call.1} parent=1 // pred_check
      _
    $region39: #{tpu_custom_call.1} parent=1 // pred_check_branch
      %100 = sbr.rel (0) target = $region41
    $region40: #{tpu_custom_call.1} parent=1 // pred_region
      %102 = dma.done [#allocation9], 256
    $region41: #{tpu_custom_call.1} parent=1 // pred_fallthru
      _
    %v103 = vld [vmem:[#allocation2] sm:$0xff]
    %v104 = vld [vmem:[#allocation2 + $0x8] sm:$0xff]
    %v105 = vld [vmem:[#allocation5] sm:$0xff]
    %v106 = vld [vmem:[#allocation5 + $0x8] sm:$0xff]
    %v107 = vld [vmem:[#allocation10] sm:$0xff]
    %v108 = vld [vmem:[#allocation10 + $0x8] sm:$0xff]
    %v109 = vld [vmem:[#allocation7] sm:$0xff]
    %v110 = vld [vmem:[#allocation7 + $0x8] sm:$0xff]
    %v111 = vsub.f32 %v109, %v103
    %v112 = vsub.f32 %v110, %v104
    %v113 = vld [vmem:[#allocation8] sm:$0xff]
    %v114 = vld [vmem:[#allocation8 + $0x8] sm:$0xff]
    %v115 = vsub.f32 %v113, %v105
    %v116 = vsub.f32 %v114, %v106
    %v117 = vmul.f32 %v111, %v111
    %v118 = vmul.f32 %v112, %v112
    %v119 = vmul.f32 %v117, %v107
    %v120 = vmul.f32 %v118, %v108
    %v121 = vmul.f32 %v115, %v115
    %v122 = vmul.f32 %v116, %v116
    %v123 = vmul.f32 %v121, %v107
    %v124 = vmul.f32 %v122, %v108
    %125 = vst [vmem:[#allocation11] sm:$0xff] %v119
    %126 = vst [vmem:[#allocation11 + $0x8] sm:$0xff] %v120
    %127 = vst [vmem:[#allocation12] sm:$0xff] %v123
    %128 = vst [vmem:[#allocation12 + $0x8] sm:$0xff] %v124
    %vm129 = vcmp.ge.f32.partialorder %v103, 0.1
    %vm130 = vcmp.ge.f32.partialorder %v104, 0.1
    %v131 = vsel %vm129, 1, 0
    %v132 = vsel %vm130, 1, 0
    %v133 = vcvt.s32.f32 %v131
    %v134 = vcvt.s32.f32 %v132
    %vm135 = vcmp.ge.f32.partialorder %v105, 0.1
    %vm136 = vcmp.ge.f32.partialorder %v106, 0.1
    %v137 = vsel %vm135, 1, 0
    %v138 = vsel %vm136, 1, 0
    %v139 = vcvt.s32.f32 %v137
    %v140 = vcvt.s32.f32 %v138
    %v141 = vrot.slane %v133, 4
    %v142 = vadd.f32 %v133, %v141
    %v143 = vrot.slane %v142, 2
    %v144 = vadd.f32 %v142, %v143
    %v145 = vrot.slane %v144, 1
    %v146 = vadd.f32 %v144, %v145
    %v147 = vrot.slane %v134, 4
    %v148 = vadd.f32 %v134, %v147
    %v149 = vrot.slane %v148, 2
    %v150 = vadd.f32 %v148, %v149
    %v151 = vrot.slane %v150, 1
    %v152 = vadd.f32 %v150, %v151
    %v153 = vmul.f32 %v119, %v133
    %v154 = vmul.f32 %v120, %v134
    %v155 = vrot.slane %v153, 4
    %v156 = vadd.f32 %v153, %v155
    %v157 = vrot.slane %v156, 2
    %v158 = vadd.f32 %v156, %v157
    %v159 = vrot.slane %v158, 1
    %v160 = vadd.f32 %v158, %v159
    %v161 = vrot.slane %v154, 4
    %v162 = vadd.f32 %v154, %v161
    %v163 = vrot.slane %v162, 2
    %v164 = vadd.f32 %v162, %v163
    %v165 = vrot.slane %v164, 1
    %v166 = vadd.f32 %v164, %v165
    %v167 = vrot.slane %v119, 4
    %v168 = vadd.f32 %v119, %v167
    %v169 = vrot.slane %v168, 2
    %v170 = vadd.f32 %v168, %v169
    %v171 = vrot.slane %v170, 1
    %v172 = vadd.f32 %v170, %v171
    %v173 = vrot.slane %v120, 4
    %v174 = vadd.f32 %v120, %v173
    %v175 = vrot.slane %v174, 2
    %v176 = vadd.f32 %v174, %v175
    %v177 = vrot.slane %v176, 1
    %v178 = vadd.f32 %v176, %v177
    %v179 = vrot.slane %v139, 4
    %v180 = vadd.f32 %v139, %v179
    %v181 = vrot.slane %v180, 2
    %v182 = vadd.f32 %v180, %v181
    %v183 = vrot.slane %v182, 1
    %v184 = vadd.f32 %v182, %v183
    %v185 = vrot.slane %v140, 4
    %v186 = vadd.f32 %v140, %v185
    %v187 = vrot.slane %v186, 2
    %v188 = vadd.f32 %v186, %v187
    %v189 = vrot.slane %v188, 1
    %v190 = vadd.f32 %v188, %v189
    %v191 = vmul.f32 %v123, %v139
    %v192 = vmul.f32 %v124, %v140
    %v193 = vrot.slane %v191, 4
    %v194 = vadd.f32 %v191, %v193
    %v195 = vrot.slane %v194, 2
    %v196 = vadd.f32 %v194, %v195
    %v197 = vrot.slane %v196, 1
    %v198 = vadd.f32 %v196, %v197
    %v199 = vrot.slane %v192, 4
    %v200 = vadd.f32 %v192, %v199
    %v201 = vrot.slane %v200, 2
    %v202 = vadd.f32 %v200, %v201
    %v203 = vrot.slane %v202, 1
    %v204 = vadd.f32 %v202, %v203
    %v205 = vrot.slane %v123, 4
    %v206 = vadd.f32 %v123, %v205
    %v207 = vrot.slane %v206, 2
    %v208 = vadd.f32 %v206, %v207
    %v209 = vrot.slane %v208, 1
    %v210 = vadd.f32 %v208, %v209
    %v211 = vrot.slane %v124, 4
    %v212 = vadd.f32 %v124, %v211
    %v213 = vrot.slane %v212, 2
    %v214 = vadd.f32 %v212, %v213
    %v215 = vrot.slane %v214, 1
    %v216 = vadd.f32 %v214, %v215
    %vm217 = vcmask 1040384
    %v218 = vsel %vm217, %v146, %v160
    %v219 = vsel %vm217, %v152, %v166
    %vm220 = vcmask 1041408
    %v221 = vsel %vm220, %v218, %v172
    %v222 = vsel %vm220, %v219, %v178
    %vm223 = vcmask 1042432
    %v224 = vsel %vm223, %v221, %v184
    %v225 = vsel %vm223, %v222, %v190
    %vm226 = vcmask 1043456
    %v227 = vsel %vm226, %v224, %v198
    %v228 = vsel %vm226, %v225, %v204
    %vm229 = vcmask 1044480
    %v230 = vsel %vm229, %v227, %v210
    %v231 = vsel %vm229, %v228, %v216
    %vm232 = vcmask 1045504
    %v233 = vsel %vm232, %v230, 0.0
    %v234 = vsel %vm232, %v231, 0.0
    %vm235 = vcmask 1046528
    %v236 = vsel %vm235, %v233, 0.0
    %v237 = vsel %vm235, %v234, 0.0
    %238 = vst [vmem:[#allocation14] sm:$0xff] %v236
    %239 = vst [vmem:[#allocation14 + $0x8] sm:$0xff] %v237
    // Predicated region
    $region42: #{tpu_custom_call.1} parent=1 // pred_check
      _
    $region43: #{tpu_custom_call.1} parent=1 // pred_check_branch
      %241 = sbr.rel (0) target = $region45
    $region44: #{tpu_custom_call.1} parent=1 // pred_region
      %243 = vsyncadd [#allocation4], 0
      %s244 = sshll.u32 [#allocation11], 4
      %s245 = int_to_ptr.vmem [resolvable:$true] %s244
      %s246 = sshll.u32 %s5, 4
      %s247 = int_to_ptr.hbm [resolvable:$true] %s246
      %252 = dma.vmem_to_hbm [thread:$0]  %s245, 256, %s247, [#allocation4], 128, 128, 8
    $region45: #{tpu_custom_call.1} parent=1 // pred_fallthru
      _
    // Predicated region
    $region46: #{tpu_custom_call.1} parent=1 // pred_check
      _
    $region47: #{tpu_custom_call.1} parent=1 // pred_check_branch
      %254 = sbr.rel (0) target = $region49
    $region48: #{tpu_custom_call.1} parent=1 // pred_region
      %256 = vsyncadd [#allocation13], 0
      %s257 = sshll.u32 [#allocation12], 4
      %s258 = int_to_ptr.vmem [resolvable:$true] %s257
      %s259 = sshll.u32 %s6, 4
      %s260 = int_to_ptr.hbm [resolvable:$true] %s259
      %265 = dma.vmem_to_hbm [thread:$0]  %s258, 256, %s260, [#allocation13], 128, 128, 8
    $region49: #{tpu_custom_call.1} parent=1 // pred_fallthru
      _
    // Predicated region
    $region50: #{tpu_custom_call.1} parent=1 // pred_check
      _
    $region51: #{tpu_custom_call.1} parent=1 // pred_check_branch
      %267 = sbr.rel (0) target = $region53
    $region52: #{tpu_custom_call.1} parent=1 // pred_region
      %269 = vsyncadd [#allocation13], 0
      %s270 = sshll.u32 [#allocation14], 4
      %s271 = int_to_ptr.vmem [resolvable:$true] %s270
      %s272 = sshll.u32 %s7, 4
      %s273 = int_to_ptr.hbm [resolvable:$true] %s272
      %278 = dma.vmem_to_hbm [thread:$0]  %s271, 256, %s273, [#allocation13], 128, 128, 8
    $region53: #{tpu_custom_call.1} parent=1 // pred_fallthru
      _
    // Predicated region
    $region54: #{tpu_custom_call.1} parent=1 // pred_check
      _
    $region55: #{tpu_custom_call.1} parent=1 // pred_check_branch
      %280 = sbr.rel (0) target = $region57
    $region56: #{tpu_custom_call.1} parent=1 // pred_region
      %282 = dma.done [#allocation4], 256
    $region57: #{tpu_custom_call.1} parent=1 // pred_fallthru
      _
    // Predicated region
    $region58: #{tpu_custom_call.1} parent=1 // pred_check
      _
    $region59: #{tpu_custom_call.1} parent=1 // pred_check_branch
      %284 = sbr.rel (0) target = $region61
    $region60: #{tpu_custom_call.1} parent=1 // pred_region
      %286 = dma.done [#allocation13], 256
    $region61: #{tpu_custom_call.1} parent=1 // pred_fallthru
      _
    // Predicated region
    $region62: #{tpu_custom_call.1} parent=1 // pred_check
      _
    $region63: #{tpu_custom_call.1} parent=1 // pred_check_branch
      %288 = sbr.rel (0) target = $region65
    $region64: #{tpu_custom_call.1} parent=1 // pred_region
      %290 = dma.done [#allocation13], 256
    $region65: #{tpu_custom_call.1} parent=1 // pred_fallthru
      _
    %291 = vsyncpa [#allocation3], 1
    %292 = vsyncpa [#allocation6], 1
    %293 = vsyncpa [#allocation9], 1
    %294 = vsyncpa [#allocation4], 1
    %295 = vsyncpa [#allocation13], 1

</llo_original>
